<compile_context>
chip_gen: v7x
topology: tpu7x:2x2x1
jax: 0.10.0
libtpu: 0.0.40
codegen_flags: <defaults>
</compile_context>

<pallas_src>
import functools

import jax
import jax.numpy as jnp
from jax.experimental import pallas as pl
from jax.experimental.pallas import tpu as pltpu


def _round_up(x, m):
    return -(-x // m) * m


# -----------------------------------------------------------------------------
# Fused kernel: AirTNN layer 1 + AirTNN layer 2 + max-pool + 2-layer MLP head.
# -----------------------------------------------------------------------------
def _fused_backbone_kernel(xr_ref, lu_ref, w12_ref, head_ref, o_ref, *,
                           batch, n, hidden, k, l2_off, head_w, ow_off,
                           n_classes):
    f32 = jnp.float32
    bn = batch * n

    xr = xr_ref[...].astype(f32)      # (B*N, 1)        row-major activations
    lu = lu_ref[...].astype(f32)      # (2*B*N, B*N)    [block_diag(L); block_diag(U)]
    w12 = w12_ref[...].astype(f32)    # layer-1 + layer-2 weight slab, width H
    head = head_ref[...].astype(f32)  # MLP-head slab (enc_w/enc_b/out_w/out_b), width W

    def shift_terms(cur):
        # One matmul produces both L@cur and U@cur (rows [0:BN] / [BN:2BN]).
        s = jnp.dot(lu, cur, preferred_element_type=f32)          # (2BN, C)
        l_terms, u_terms = [s[:bn]], [s[bn:]]
        for _ in range(1, k):                                      # higher powers (k > 1)
            l_terms.append(jnp.dot(lu[:bn], l_terms[-1], preferred_element_type=f32))
            u_terms.append(jnp.dot(lu[bn:], u_terms[-1], preferred_element_type=f32))
        return l_terms, u_terms

    # ---- layer 1 (Cin == 1): shifts + VPU outer-product channel mixing -------
    l1, u1 = shift_terms(xr)
    h1 = xr * w12[0:1, :]                                          # (BN, H)
    for i in range(k):
        h1 = h1 + l1[i] * w12[1 + i:2 + i, :]
        h1 = h1 + u1[i] * w12[1 + k + i:2 + k + i, :]
    h1 = jnp.maximum(h1, 0.0)

    # ---- layer 2: shifts + sum-of-matmuls channel mixing ---------------------
    l2, u2 = shift_terms(h1)
    h2 = jnp.dot(h1, w12[l2_off:l2_off + hidden, :], preferred_element_type=f32)
    for i in range(k):
        lo = l2_off + (1 + i) * hidden
        h2 = h2 + jnp.dot(l2[i], w12[lo:lo + hidden, :], preferred_element_type=f32)
        uo = l2_off + (1 + k + i) * hidden
        h2 = h2 + jnp.dot(u2[i], w12[uo:uo + hidden, :], preferred_element_type=f32)
    h2 = jnp.maximum(h2, 0.0)                                      # (BN, H)

    # dropout(p=0.0) is the identity — skipped.

    # ---- max-pool over the simplex axis (sublane reduce per batch block) -----
    pooled = jnp.max(h2.reshape(batch, n, hidden), axis=1)         # (B, H)

    # ---- MLP head; biases folded in as extra slab rows ------------------------
    e = jnp.dot(pooled, head[0:hidden, :], preferred_element_type=f32) \
        + head[hidden:hidden + 1, :]
    e = jnp.maximum(e, 0.0)                                        # (B, W)
    y = jnp.dot(e, head[ow_off:ow_off + head_w, :], preferred_element_type=f32) \
        + head[ow_off + head_w:ow_off + head_w + 1, :]             # (B, W)

    o_ref[...] = y[:, :n_classes].astype(o_ref.dtype)              # (B, n_classes)


# -----------------------------------------------------------------------------
# Wrapper: one pallas_call, 4 packed operands, no grid.
# -----------------------------------------------------------------------------
def backbone_forward(params, x, lower, upper, *, k=1):
    B, N, Cin = x.shape
    assert Cin == 1, "Backbone spec hardwires AirTNN(1, hidden_dim, ...)"
    H = params["l1_w0"].shape[1]
    Hf = params["enc_w"].shape[1]
    C = params["out_w"].shape[1]
    BN = B * N
    f32 = jnp.float32

    # ---- wrapper-side layout plumbing (traced once under jit) ----------------
    # Row-major activations.
    xr = x.reshape(BN, Cin).astype(f32)                            # (BN, 1)

    # Vertically stacked block-diagonal shift operators: one operand, one matmul
    # per layer yields both L@h and U@h.
    eye_b = jnp.eye(B, dtype=f32)
    l_bd = jnp.kron(eye_b, lower.astype(f32))                      # (BN, BN)
    u_bd = jnp.kron(eye_b, upper.astype(f32))                      # (BN, BN)
    lu = jnp.concatenate([l_bd, u_bd], axis=0)                     # (2BN, BN)

    # Layer-1 + layer-2 weight slab (width H, sublane-aligned blocks).
    nterms = 1 + 2 * k
    l2_off = _round_up(nterms, 8)
    w12 = jnp.zeros((l2_off + nterms * H, H), f32)
    w12 = w12.at[0:1].set(params["l1_w0"].astype(f32))             # (1, H)
    for i in range(k):
        w12 = w12.at[1 + i].set(params["l1_wl"][i, 0].astype(f32))
        w12 = w12.at[1 + k + i].set(params["l1_wu"][i, 0].astype(f32))
    w12 = w12.at[l2_off:l2_off + H].set(params["l2_w0"].astype(f32))
    for i in range(k):
        lo = l2_off + (1 + i) * H
        w12 = w12.at[lo:lo + H].set(params["l2_wl"][i].astype(f32))
        uo = l2_off + (1 + k + i) * H
        w12 = w12.at[uo:uo + H].set(params["l2_wu"][i].astype(f32))

    # MLP-head slab: enc_w / enc_b / out_w (lane-padded) / out_b as rows.
    W = max(Hf, C)
    ow_off = _round_up(H + 1, 8)
    head = jnp.zeros((ow_off + W + 1, W), f32)
    head = head.at[0:H, 0:Hf].set(params["enc_w"].astype(f32))
    head = head.at[H:H + 1, 0:Hf].set(params["enc_b"].astype(f32))
    head = head.at[ow_off:ow_off + Hf, 0:C].set(params["out_w"].astype(f32))
    head = head.at[ow_off + W:ow_off + W + 1, 0:C].set(params["out_b"].astype(f32))

    kern = functools.partial(_fused_backbone_kernel,
                             batch=B, n=N, hidden=H, k=k, l2_off=l2_off,
                             head_w=W, ow_off=ow_off, n_classes=C)

    vmem = pl.BlockSpec(memory_space=pltpu.MemorySpace.VMEM)
    flops = (2 * (2 * BN) * BN * Cin * k          # layer-1 shifts
             + 2 * BN * nterms * Cin * H          # layer-1 channel mix
             + 2 * (2 * BN) * BN * H * k          # layer-2 shifts
             + 2 * BN * nterms * H * H            # layer-2 channel mix
             + 2 * B * H * W + 2 * B * W * W)     # MLP head
    bytes_accessed = 4 * (xr.size + lu.size + w12.size + head.size + B * C)

    return pl.pallas_call(
        kern,
        out_shape=jax.ShapeDtypeStruct((B, C), jnp.float32),
        in_specs=[vmem] * 4,
        out_specs=vmem,
        cost_estimate=pl.CostEstimate(flops=flops, transcendentals=0,
                                      bytes_accessed=bytes_accessed),
    )(xr, lu, w12, head)


# -----------------------------------------------------------------------------
# Parameters (deterministic, PyTorch-Linear-style uniform init).
# -----------------------------------------------------------------------------
def init_params(key, *, in_channels=1, hidden_dim=32, hidden_dim_ffnn=64,
                n_classes=11, k=1):
    keys = jax.random.split(key, 10)

    def lin(kk, fan_in, shape):
        bound = 1.0 / float(fan_in) ** 0.5
        return jax.random.uniform(kk, shape, jnp.float32, -bound, bound)

    return {
        "l1_w0": lin(keys[0], in_channels, (in_channels, hidden_dim)),
        "l1_wl": lin(keys[1], in_channels, (k, in_channels, hidden_dim)),
        "l1_wu": lin(keys[2], in_channels, (k, in_channels, hidden_dim)),
        "l2_w0": lin(keys[3], hidden_dim, (hidden_dim, hidden_dim)),
        "l2_wl": lin(keys[4], hidden_dim, (k, hidden_dim, hidden_dim)),
        "l2_wu": lin(keys[5], hidden_dim, (k, hidden_dim, hidden_dim)),
        "enc_w": lin(keys[6], hidden_dim, (hidden_dim, hidden_dim_ffnn)),
        "enc_b": lin(keys[7], hidden_dim, (1, hidden_dim_ffnn)),
        "out_w": lin(keys[8], hidden_dim_ffnn, (hidden_dim_ffnn, n_classes)),
        "out_b": lin(keys[9], hidden_dim_ffnn, (1, n_classes)),
    }


# Pure-JAX reference (same math) for a sanity check.
def backbone_reference(params, x, lower, upper, *, k=1):
    hi = jax.lax.Precision.HIGHEST

    def layer(h, w0, wl, wu):
        acc = jnp.einsum("bnc,ch->bnh", h, w0, precision=hi)
        xl, xu = h, h
        for i in range(k):
            xl = jnp.einsum("nm,bmc->bnc", lower, xl, precision=hi)
            xu = jnp.einsum("nm,bmc->bnc", upper, xu, precision=hi)
            acc = acc + jnp.einsum("bnc,ch->bnh", xl, wl[i], precision=hi)
            acc = acc + jnp.einsum("bnc,ch->bnh", xu, wu[i], precision=hi)
        return jnp.maximum(acc, 0.0)

    h = layer(x, params["l1_w0"], params["l1_wl"], params["l1_wu"])
    h = layer(h, params["l2_w0"], params["l2_wl"], params["l2_wu"])
    g = jnp.max(h, axis=1)
    e = jnp.maximum(jnp.dot(g, params["enc_w"], precision=hi) + params["enc_b"], 0.0)
    return jnp.dot(e, params["out_w"], precision=hi) + params["out_b"]


if __name__ == "__main__":
    B, N, Cin = 2, 16, 1
    hidden_dim, hidden_dim_ffnn, n_classes, k = 32, 64, 11, 1

    root = jax.random.PRNGKey(0)
    k_param, k_x, k_l, k_u = jax.random.split(root, 4)

    params = init_params(k_param, in_channels=Cin, hidden_dim=hidden_dim,
                         hidden_dim_ffnn=hidden_dim_ffnn, n_classes=n_classes, k=k)

    x = jax.random.normal(k_x, (B, N, Cin), jnp.float32)
    # Symmetric lower / upper shift operators (Laplacian-like), shared across batch.
    a_l = jax.random.normal(k_l, (N, N), jnp.float32)
    a_u = jax.random.normal(k_u, (N, N), jnp.float32)
    lower = 0.5 * (a_l + a_l.T) / N
    upper = 0.5 * (a_u + a_u.T) / N

    fwd = jax.jit(functools.partial(backbone_forward, k=k))
    y = fwd(params, x, lower, upper)
    jax.block_until_ready(y)

    y_ref = backbone_reference(params, x, lower, upper, k=k)
    assert y.shape == (B, n_classes), y.shape
    assert jnp.allclose(y, y_ref, rtol=2e-3, atol=2e-3), \
        float(jnp.max(jnp.abs(y - y_ref)))

    print("KERNEL_OK")
</pallas_src>

<mosaic_0001>
module attributes {stable_mosaic.version = 11 : i64} {
  func.func @_fused_backbone_kernel(%arg0: memref<32x1xf32, #tpu.memory_space<vmem>>, %arg1: memref<64x32xf32, #tpu.memory_space<vmem>>, %arg2: memref<104x32xf32, #tpu.memory_space<vmem>>, %arg3: memref<105x64xf32, #tpu.memory_space<vmem>>, %arg4: memref<2x11xf32, #tpu.memory_space<vmem>>) attributes {dimension_semantics = [], scalar_prefetch = 0 : i64, scratch_operands = 0 : i64, tpu.core_type = #tpu.core_type<tc>} {
    %c0 = arith.constant 0 : index
    %c0_0 = arith.constant 0 : index
    %0 = vector.load %arg0[%c0, %c0_0] : memref<32x1xf32, #tpu.memory_space<vmem>>, vector<32x1xf32>
    %c0_1 = arith.constant 0 : index
    %c0_2 = arith.constant 0 : index
    %1 = vector.load %arg1[%c0_1, %c0_2] : memref<64x32xf32, #tpu.memory_space<vmem>>, vector<64x32xf32>
    %c0_3 = arith.constant 0 : index
    %c0_4 = arith.constant 0 : index
    %2 = vector.load %arg2[%c0_3, %c0_4] : memref<104x32xf32, #tpu.memory_space<vmem>>, vector<104x32xf32>
    %c0_5 = arith.constant 0 : index
    %c0_6 = arith.constant 0 : index
    %3 = vector.load %arg3[%c0_5, %c0_6] : memref<105x64xf32, #tpu.memory_space<vmem>>, vector<105x64xf32>
    %cst = arith.constant dense<0.000000e+00> : vector<64x1xf32>
    %4 = tpu.matmul %1, %0, %cst {dimension_numbers = #tpu.dot_dimension_numbers<[1], [0], [0], [1], [0, 0, 1, 1], [], []>} : vector<64x32xf32>, vector<32x1xf32>, vector<64x1xf32> -> vector<64x1xf32>
    %5 = vector.extract_strided_slice %4 {offsets = [0, 0], sizes = [32, 1], strides = [1, 1]} : vector<64x1xf32> to vector<32x1xf32>
    %6 = vector.extract_strided_slice %4 {offsets = [32, 0], sizes = [32, 1], strides = [1, 1]} : vector<64x1xf32> to vector<32x1xf32>
    %7 = vector.extract_strided_slice %2 {offsets = [0, 0], sizes = [1, 32], strides = [1, 1]} : vector<104x32xf32> to vector<1x32xf32>
    %8 = vector.broadcast %0 : vector<32x1xf32> to vector<32x32xf32>
    %9 = vector.broadcast %7 : vector<1x32xf32> to vector<32x32xf32>
    %10 = arith.mulf %8, %9 : vector<32x32xf32>
    %11 = vector.extract_strided_slice %2 {offsets = [1, 0], sizes = [1, 32], strides = [1, 1]} : vector<104x32xf32> to vector<1x32xf32>
    %12 = vector.broadcast %5 : vector<32x1xf32> to vector<32x32xf32>
    %13 = vector.broadcast %11 : vector<1x32xf32> to vector<32x32xf32>
    %14 = arith.mulf %12, %13 : vector<32x32xf32>
    %15 = arith.addf %10, %14 : vector<32x32xf32>
    %16 = vector.extract_strided_slice %2 {offsets = [2, 0], sizes = [1, 32], strides = [1, 1]} : vector<104x32xf32> to vector<1x32xf32>
    %17 = vector.broadcast %6 : vector<32x1xf32> to vector<32x32xf32>
    %18 = vector.broadcast %16 : vector<1x32xf32> to vector<32x32xf32>
    %19 = arith.mulf %17, %18 : vector<32x32xf32>
    %20 = arith.addf %15, %19 : vector<32x32xf32>
    %cst_7 = arith.constant 0.000000e+00 : f32
    %21 = vector.broadcast %cst_7 : f32 to vector<32x32xf32>
    %22 = arith.maximumf %20, %21 : vector<32x32xf32>
    %cst_8 = arith.constant dense<0.000000e+00> : vector<64x32xf32>
    %23 = tpu.matmul %1, %22, %cst_8 {dimension_numbers = #tpu.dot_dimension_numbers<[1], [0], [0], [1], [0, 0, 1, 1], [], []>} : vector<64x32xf32>, vector<32x32xf32>, vector<64x32xf32> -> vector<64x32xf32>
    %24 = vector.extract_strided_slice %23 {offsets = [0, 0], sizes = [32, 32], strides = [1, 1]} : vector<64x32xf32> to vector<32x32xf32>
    %25 = vector.extract_strided_slice %23 {offsets = [32, 0], sizes = [32, 32], strides = [1, 1]} : vector<64x32xf32> to vector<32x32xf32>
    %26 = vector.extract_strided_slice %2 {offsets = [8, 0], sizes = [32, 32], strides = [1, 1]} : vector<104x32xf32> to vector<32x32xf32>
    %cst_9 = arith.constant dense<0.000000e+00> : vector<32x32xf32>
    %27 = tpu.matmul %22, %26, %cst_9 {dimension_numbers = #tpu.dot_dimension_numbers<[1], [0], [0], [1], [0, 0, 1, 1], [], []>} : vector<32x32xf32>, vector<32x32xf32>, vector<32x32xf32> -> vector<32x32xf32>
    %28 = vector.extract_strided_slice %2 {offsets = [40, 0], sizes = [32, 32], strides = [1, 1]} : vector<104x32xf32> to vector<32x32xf32>
    %cst_10 = arith.constant dense<0.000000e+00> : vector<32x32xf32>
    %29 = tpu.matmul %24, %28, %cst_10 {dimension_numbers = #tpu.dot_dimension_numbers<[1], [0], [0], [1], [0, 0, 1, 1], [], []>} : vector<32x32xf32>, vector<32x32xf32>, vector<32x32xf32> -> vector<32x32xf32>
    %30 = arith.addf %27, %29 : vector<32x32xf32>
    %31 = vector.extract_strided_slice %2 {offsets = [72, 0], sizes = [32, 32], strides = [1, 1]} : vector<104x32xf32> to vector<32x32xf32>
    %cst_11 = arith.constant dense<0.000000e+00> : vector<32x32xf32>
    %32 = tpu.matmul %25, %31, %cst_11 {dimension_numbers = #tpu.dot_dimension_numbers<[1], [0], [0], [1], [0, 0, 1, 1], [], []>} : vector<32x32xf32>, vector<32x32xf32>, vector<32x32xf32> -> vector<32x32xf32>
    %33 = arith.addf %30, %32 : vector<32x32xf32>
    %cst_12 = arith.constant 0.000000e+00 : f32
    %34 = vector.broadcast %cst_12 : f32 to vector<32x32xf32>
    %35 = arith.maximumf %33, %34 : vector<32x32xf32>
    %36 = vector.shape_cast %35 : vector<32x32xf32> to vector<2x16x32xf32>
    %cst_13 = arith.constant dense<0xFF800000> : vector<2x32xf32>
    %37 = vector.multi_reduction <maximumf>, %36, %cst_13 [1] : vector<2x16x32xf32> to vector<2x32xf32>
    %38 = vector.extract_strided_slice %3 {offsets = [0, 0], sizes = [32, 64], strides = [1, 1]} : vector<105x64xf32> to vector<32x64xf32>
    %cst_14 = arith.constant dense<0.000000e+00> : vector<2x64xf32>
    %39 = tpu.matmul %37, %38, %cst_14 {dimension_numbers = #tpu.dot_dimension_numbers<[1], [0], [0], [1], [0, 0, 1, 1], [], []>} : vector<2x32xf32>, vector<32x64xf32>, vector<2x64xf32> -> vector<2x64xf32>
    %40 = vector.extract_strided_slice %3 {offsets = [32, 0], sizes = [1, 64], strides = [1, 1]} : vector<105x64xf32> to vector<1x64xf32>
    %41 = vector.broadcast %40 : vector<1x64xf32> to vector<2x64xf32>
    %42 = arith.addf %39, %41 : vector<2x64xf32>
    %cst_15 = arith.constant 0.000000e+00 : f32
    %43 = vector.broadcast %cst_15 : f32 to vector<2x64xf32>
    %44 = arith.maximumf %42, %43 : vector<2x64xf32>
    %45 = vector.extract_strided_slice %3 {offsets = [40, 0], sizes = [64, 64], strides = [1, 1]} : vector<105x64xf32> to vector<64x64xf32>
    %cst_16 = arith.constant dense<0.000000e+00> : vector<2x64xf32>
    %46 = tpu.matmul %44, %45, %cst_16 {dimension_numbers = #tpu.dot_dimension_numbers<[1], [0], [0], [1], [0, 0, 1, 1], [], []>} : vector<2x64xf32>, vector<64x64xf32>, vector<2x64xf32> -> vector<2x64xf32>
    %47 = vector.extract_strided_slice %3 {offsets = [104, 0], sizes = [1, 64], strides = [1, 1]} : vector<105x64xf32> to vector<1x64xf32>
    %48 = vector.broadcast %47 : vector<1x64xf32> to vector<2x64xf32>
    %49 = arith.addf %46, %48 : vector<2x64xf32>
    %50 = vector.extract_strided_slice %49 {offsets = [0, 0], sizes = [2, 11], strides = [1, 1]} : vector<2x64xf32> to vector<2x11xf32>
    %c0_17 = arith.constant 0 : index
    %c0_18 = arith.constant 0 : index
    %51 = vector.load %arg4[%c0_17, %c0_18] : memref<2x11xf32, #tpu.memory_space<vmem>>, vector<2x11xf32>
    tpu.vector_store %arg4[%c0_17, %c0_18], %50 {strides = array<i32>} : memref<2x11xf32, #tpu.memory_space<vmem>>, vector<2x11xf32>,
    return
  }
}

</mosaic_0001>

<llo_original>
// kernel: backbone_forward.1
$region0: #{backbone_forward.1}
  #allocation0 [shape = 'u32[]', space=smem, size = 0x4, offset = 0x4, fixed_abs, tag = 'smem constant byte address 0x4 - core index']
  #allocation1 [shape = 'u32[144,128]{1,0:T(1,128)}', space=vmem, size = 0x12000, scoped, tag = 'internal scratch']
  %s0 = inlined_call_operand.vmem [shape: f32[32,1], index: 0, kind: input, shape index: {}]
  %s1 = inlined_call_operand.vmem [shape: f32[64,32], index: 1, kind: input, shape index: {}]
  %s2 = inlined_call_operand.vmem [shape: f32[104,32], index: 2, kind: input, shape index: {}]
  %s3 = inlined_call_operand.vmem [shape: f32[105,64], index: 3, kind: input, shape index: {}]
  %s4 = inlined_call_operand.hbm [shape: f32[2,11], index: 4, kind: output, shape index: {}]
  %s5 = sld [smem:[#allocation0]]
  $region26: #{backbone_forward.1} parent=0
    _
  %s7 = ssub.s32 1, %s5
  %s8 = scalar_select 0, %s7, %s5
  $region1: #{backbone_forward.1} parent=0
    #allocation2 [shape = 'u8[1024]{0}', space=vmem, size = 0x400, scoped, tag = 'output window, operand 0, single buffered']
    #allocation3 [shape = 's32[1]{0}', space=sflag, size = 0x4, scoped, tag = 'scoped memory for backbone_forward.1']
    %9 = vsyncpa [#allocation3], 0
    // Predicated region
    $region2: #{backbone_forward.1} parent=1 // pred_check
      _
    $region3: #{backbone_forward.1} parent=1 // pred_check_branch
      %11 = sbr.rel (0) target = $region5
    $region4: #{backbone_forward.1} parent=1 // pred_region
      _
    $region5: #{backbone_forward.1} parent=1 // pred_fallthru
      _
    // Predicated region
    $region6: #{backbone_forward.1} parent=1 // pred_check
      _
    $region7: #{backbone_forward.1} parent=1 // pred_check_branch
      %13 = sbr.rel (0) target = $region9
    $region8: #{backbone_forward.1} parent=1 // pred_region
      _
    $region9: #{backbone_forward.1} parent=1 // pred_fallthru
      _
    // Predicated region
    $region10: #{backbone_forward.1} parent=1 // pred_check
      _
    $region11: #{backbone_forward.1} parent=1 // pred_check_branch
      %15 = sbr.rel (0) target = $region13
    $region12: #{backbone_forward.1} parent=1 // pred_region
      _
    $region13: #{backbone_forward.1} parent=1 // pred_fallthru
      _
    // Predicated region
    $region14: #{backbone_forward.1} parent=1 // pred_check
      _
    $region15: #{backbone_forward.1} parent=1 // pred_check_branch
      %17 = sbr.rel (0) target = $region17
    $region16: #{backbone_forward.1} parent=1 // pred_region
      _
    $region17: #{backbone_forward.1} parent=1 // pred_fallthru
      _
    %v18 = vld [vmem:[%s0] sm:$0xff]
    %v19 = vld [vmem:[%s0 + $0x8] sm:$0xff]
    %v20 = vld [vmem:[%s0 + $0x10] sm:$0xff]
    %v21 = vld [vmem:[%s0 + $0x18] sm:$0xff]
    %v22 = vld [vmem:[%s1] sm:$0xff]
    %v23 = vld [vmem:[%s1 + $0x8] sm:$0xff]
    %v24 = vld [vmem:[%s1 + $0x10] sm:$0xff]
    %v25 = vld [vmem:[%s1 + $0x18] sm:$0xff]
    %v26 = vld [vmem:[%s1 + $0x20] sm:$0xff]
    %v27 = vld [vmem:[%s1 + $0x28] sm:$0xff]
    %v28 = vld [vmem:[%s1 + $0x30] sm:$0xff]
    %v29 = vld [vmem:[%s1 + $0x38] sm:$0xff]
    %v30 = vld [vmem:[%s2] sm:$0xff]
    %v31 = vld [vmem:[%s2 + $0x8] sm:$0xff]
    %v32 = vld [vmem:[%s2 + $0x10] sm:$0xff]
    %v33 = vld [vmem:[%s2 + $0x18] sm:$0xff]
    %v34 = vld [vmem:[%s2 + $0x20] sm:$0xff]
    %v35 = vld [vmem:[%s2 + $0x28] sm:$0xff]
    %v36 = vld [vmem:[%s2 + $0x30] sm:$0xff]
    %v37 = vld [vmem:[%s2 + $0x38] sm:$0xff]
    %v38 = vld [vmem:[%s2 + $0x40] sm:$0xff]
    %v39 = vld [vmem:[%s2 + $0x48] sm:$0xff]
    %v40 = vld [vmem:[%s2 + $0x50] sm:$0xff]
    %v41 = vld [vmem:[%s2 + $0x58] sm:$0xff]
    %v42 = vld [vmem:[%s2 + $0x60] sm:$0xff]
    %v43 = vld [vmem:[%s3] sm:$0xff]
    %v44 = vld [vmem:[%s3 + $0x8] sm:$0xff]
    %v45 = vld [vmem:[%s3 + $0x10] sm:$0xff]
    %v46 = vld [vmem:[%s3 + $0x18] sm:$0xff]
    %v47 = vld [vmem:[%s3 + $0x20] sm:$0xff]
    %v48 = vld [vmem:[%s3 + $0x28] sm:$0xff]
    %v49 = vld [vmem:[%s3 + $0x30] sm:$0xff]
    %v50 = vld [vmem:[%s3 + $0x38] sm:$0xff]
    %v51 = vld [vmem:[%s3 + $0x40] sm:$0xff]
    %v52 = vld [vmem:[%s3 + $0x48] sm:$0xff]
    %v53 = vld [vmem:[%s3 + $0x50] sm:$0xff]
    %v54 = vld [vmem:[%s3 + $0x58] sm:$0xff]
    %v55 = vld [vmem:[%s3 + $0x60] sm:$0xff]
    %v56 = vld [vmem:[%s3 + $0x68] sm:$0x1]
    %vm57 = vcmask 261120
    %v59 = vsel %vm57, %v22, 0
    %v62 = vsel %vm57, %v23, 0
    %v65 = vsel %vm57, %v24, 0
    %v68 = vsel %vm57, %v25, 0
    %v71 = vsel %vm57, %v26, 0
    %v74 = vsel %vm57, %v27, 0
    %v77 = vsel %vm57, %v28, 0
    %v80 = vsel %vm57, %v29, 0
    %82 = vmatprep.subr.mxu0 0.0
    %83 = vmatpush1.msra.mxu0 %v18
    %84 = vmatprep.subr.mxu0 0.0
    %85 = vmatpush1.msra.mxu0 %v19
    %86 = vmatprep.subr.mxu0 0.0
    %87 = vmatpush1.msra.mxu0 %v20
    %88 = vmatprep.subr.mxu0 0.0
    %89 = vmatpush1.msra.mxu0 %v21
    %90 = vmatprep.subr.mxu0 0.0
    %91 = vmatpush1.msra.mxu0 0.0
    %92 = vmatprep.subr.mxu0 0.0
    %93 = vmatpush1.msra.mxu0 0.0
    %94 = vmatprep.subr.mxu0 0.0
    %95 = vmatpush1.msra.mxu0 0.0
    %96 = vmatprep.subr.mxu0 0.0
    %97 = vmatpush1.msra.mxu0 0.0
    %98 = vmatprep.subr.mxu0 0.0
    %99 = vmatpush1.msra.mxu0 0.0
    %100 = vmatprep.subr.mxu0 0.0
    %101 = vmatpush1.msra.mxu0 0.0
    %102 = vmatprep.subr.mxu0 0.0
    %103 = vmatpush1.msra.mxu0 0.0
    %104 = vmatprep.subr.mxu0 0.0
    %105 = vmatpush1.msra.mxu0 0.0
    %106 = vmatprep.subr.mxu0 0.0
    %107 = vmatpush1.msra.mxu0 0.0
    %108 = vmatprep.subr.mxu0 0.0
    %109 = vmatpush1.msra.mxu0 0.0
    %110 = vmatprep.subr.mxu0 0.0
    %111 = vmatpush1.msra.mxu0 0.0
    %112 = vmatprep.subr.mxu0 0.0
    %113 = vmatpush1.msra.mxu0 0.0
    %114 = vmatprep.subr.mxu0 0.0
    %115 = vmatpush1.msra.mxu0 0.0
    %116 = vmatprep.subr.mxu0 0.0
    %117 = vmatpush1.msra.mxu0 0.0
    %118 = vmatprep.subr.mxu0 0.0
    %119 = vmatpush1.msra.mxu0 0.0
    %120 = vmatprep.subr.mxu0 0.0
    %121 = vmatpush1.msra.mxu0 0.0
    %122 = vmatprep.subr.mxu0 0.0
    %123 = vmatpush1.msra.mxu0 0.0
    %124 = vmatprep.subr.mxu0 0.0
    %125 = vmatpush1.msra.mxu0 0.0
    %126 = vmatprep.subr.mxu0 0.0
    %127 = vmatpush1.msra.mxu0 0.0
    %128 = vmatprep.subr.mxu0 0.0
    %129 = vmatpush1.msra.mxu0 0.0
    %130 = vmatprep.subr.mxu0 0.0
    %131 = vmatpush1.msra.mxu0 0.0
    %132 = vmatprep.subr.mxu0 0.0
    %133 = vmatpush1.msra.mxu0 0.0
    %134 = vmatprep.subr.mxu0 0.0
    %135 = vmatpush1.msra.mxu0 0.0
    %136 = vmatprep.subr.mxu0 0.0
    %137 = vmatpush1.msra.mxu0 0.0
    %138 = vmatprep.subr.mxu0 0.0
    %139 = vmatpush1.msra.mxu0 0.0
    %140 = vmatprep.subr.mxu0 0.0
    %141 = vmatpush1.msra.mxu0 0.0
    %142 = vmatprep.subr.mxu0 0.0
    %143 = vmatpush1.msra.mxu0 0.0
    %144 = vmatprep.subr.mxu0 0.0
    %145 = vmatpush1.msra.mxu0 0.0
    %146 = vmatprep.mubr.f32.mxu0 0.0
    %147 = vmatmul.mubr.f32.gmra.mrb[0].mxu0 %v59
    %v148 = vpop.f32.mrb[0].mxu0
    %v149 = vadd.f32 0.0, %v148
    %v150 = vpop.f32.mrb[0].mxu0
    %151 = vmatprep.mubr.f32.mxu0 0.0
    %152 = vmatmul.mubr.f32.gmra.mrb[0].mxu0 %v62
    %v153 = vpop.f32.mrb[0].mxu0
    %v154 = vadd.f32 0.0, %v153
    %v155 = vpop.f32.mrb[0].mxu0
    %156 = vmatprep.mubr.f32.mxu0 0.0
    %157 = vmatmul.mubr.f32.gmra.mrb[0].mxu0 %v65
    %v158 = vpop.f32.mrb[0].mxu0
    %v159 = vadd.f32 0.0, %v158
    %v160 = vpop.f32.mrb[0].mxu0
    %161 = vmatprep.mubr.f32.mxu0 0.0
    %162 = vmatmul.mubr.f32.gmra.mrb[0].mxu0 %v68
    %v163 = vpop.f32.mrb[0].mxu0
    %v164 = vadd.f32 0.0, %v163
    %v165 = vpop.f32.mrb[0].mxu0
    %166 = vmatprep.mubr.f32.mxu0 0.0
    %167 = vmatmul.mubr.f32.gmra.mrb[0].mxu0 %v71
    %v168 = vpop.f32.mrb[0].mxu0
    %v169 = vadd.f32 0.0, %v168
    %v170 = vpop.f32.mrb[0].mxu0
    %171 = vmatprep.mubr.f32.mxu0 0.0
    %172 = vmatmul.mubr.f32.gmra.mrb[0].mxu0 %v74
    %v173 = vpop.f32.mrb[0].mxu0
    %v174 = vadd.f32 0.0, %v173
    %v175 = vpop.f32.mrb[0].mxu0
    %176 = vmatprep.mubr.f32.mxu0 0.0
    %177 = vmatmul.mubr.f32.gmra.mrb[0].mxu0 %v77
    %v178 = vpop.f32.mrb[0].mxu0
    %v179 = vadd.f32 0.0, %v178
    %v180 = vpop.f32.mrb[0].mxu0
    %181 = vmatprep.mubr.f32.mxu0 0.0
    %182 = vmatmul.mubr.f32.gmra.mrb[0].mxu0 %v80
    %v183 = vpop.f32.mrb[0].mxu0
    %v184 = vadd.f32 0.0, %v183
    %v185 = vpop.f32.mrb[0].mxu0
    %186 = vdwg.mxu0
    %188 = vset.pattern.permute.xlu0 0
    %189 = vperm.xlu0 %188, %v18
    %v190 = vpop.permute.xlu0 %189
    %193 = vset.pattern.permute.xlu0 0
    %194 = vperm.xlu0 %193, %v19
    %v195 = vpop.permute.xlu0 %194
    %198 = vset.pattern.permute.xlu0 0
    %199 = vperm.xlu0 %198, %v20
    %v200 = vpop.permute.xlu0 %199
    %203 = vset.pattern.permute.xlu0 0
    %204 = vperm.xlu0 %203, %v21
    %v205 = vpop.permute.xlu0 %204
    %v207 = vlaneseq
    %v208 = vshrl.u32 %v207, 7
    %v209 = vsub.s32 0, %v208
    %v210 = vrot.slane %v30, %v209
    %v211 = vmul.f32 %v190, %v210
    %v212 = vmul.f32 %v195, %v210
    %v213 = vmul.f32 %v200, %v210
    %v214 = vmul.f32 %v205, %v210
    %216 = vset.pattern.permute.xlu0 0
    %217 = vperm.xlu0 %216, %v149
    %v218 = vpop.permute.xlu0 %217
    %221 = vset.pattern.permute.xlu0 0
    %222 = vperm.xlu0 %221, %v154
    %v223 = vpop.permute.xlu0 %222
    %226 = vset.pattern.permute.xlu0 0
    %227 = vperm.xlu0 %226, %v159
    %v228 = vpop.permute.xlu0 %227
    %231 = vset.pattern.permute.xlu0 0
    %232 = vperm.xlu0 %231, %v164
    %v233 = vpop.permute.xlu0 %232
    %v235 = vlaneseq
    %v236 = vshrl.u32 %v235, 7
    %v237 = vsub.s32 1, %v236
    %v238 = vrot.slane %v30, %v237
    %v239 = vmul.f32 %v218, %v238
    %v240 = vmul.f32 %v223, %v238
    %v241 = vmul.f32 %v228, %v238
    %v242 = vmul.f32 %v233, %v238
    %v243 = vadd.f32 %v211, %v239
    %v244 = vadd.f32 %v212, %v240
    %v245 = vadd.f32 %v213, %v241
    %v246 = vadd.f32 %v214, %v242
    %248 = vset.pattern.permute.xlu0 0
    %249 = vperm.xlu0 %248, %v169
    %v250 = vpop.permute.xlu0 %249
    %253 = vset.pattern.permute.xlu0 0
    %254 = vperm.xlu0 %253, %v174
    %v255 = vpop.permute.xlu0 %254
    %258 = vset.pattern.permute.xlu0 0
    %259 = vperm.xlu0 %258, %v179
    %v260 = vpop.permute.xlu0 %259
    %263 = vset.pattern.permute.xlu0 0
    %264 = vperm.xlu0 %263, %v184
    %v265 = vpop.permute.xlu0 %264
    %v267 = vlaneseq
    %v268 = vshrl.u32 %v267, 7
    %v269 = vsub.s32 2, %v268
    %v270 = vrot.slane %v30, %v269
    %v271 = vmul.f32 %v250, %v270
    %v272 = vmul.f32 %v255, %v270
    %v273 = vmul.f32 %v260, %v270
    %v274 = vmul.f32 %v265, %v270
    %v275 = vadd.f32 %v243, %v271
    %v276 = vadd.f32 %v244, %v272
    %v277 = vadd.f32 %v245, %v273
    %v278 = vadd.f32 %v246, %v274
    %v279 = vmax.f32 %v275, 0.0
    %v280 = vmax.f32 %v276, 0.0
    %v281 = vmax.f32 %v277, 0.0
    %v282 = vmax.f32 %v278, 0.0
    %283 = vmatprep.subr.mxu0 0.0
    %284 = vmatpush1.msra.mxu0 %v279
    %285 = vmatprep.subr.mxu0 0.0
    %286 = vmatpush1.msra.mxu0 %v280
    %287 = vmatprep.subr.mxu0 0.0
    %288 = vmatpush1.msra.mxu0 %v281
    %289 = vmatprep.subr.mxu0 0.0
    %290 = vmatpush1.msra.mxu0 %v282
    %291 = vmatprep.subr.mxu0 0.0
    %292 = vmatpush1.msra.mxu0 0.0
    %293 = vmatprep.subr.mxu0 0.0
    %294 = vmatpush1.msra.mxu0 0.0
    %295 = vmatprep.subr.mxu0 0.0
    %296 = vmatpush1.msra.mxu0 0.0
    %297 = vmatprep.subr.mxu0 0.0
    %298 = vmatpush1.msra.mxu0 0.0
    %299 = vmatprep.subr.mxu0 0.0
    %300 = vmatpush1.msra.mxu0 0.0
    %301 = vmatprep.subr.mxu0 0.0
    %302 = vmatpush1.msra.mxu0 0.0
    %303 = vmatprep.subr.mxu0 0.0
    %304 = vmatpush1.msra.mxu0 0.0
    %305 = vmatprep.subr.mxu0 0.0
    %306 = vmatpush1.msra.mxu0 0.0
    %307 = vmatprep.subr.mxu0 0.0
    %308 = vmatpush1.msra.mxu0 0.0
    %309 = vmatprep.subr.mxu0 0.0
    %310 = vmatpush1.msra.mxu0 0.0
    %311 = vmatprep.subr.mxu0 0.0
    %312 = vmatpush1.msra.mxu0 0.0
    %313 = vmatprep.subr.mxu0 0.0
    %314 = vmatpush1.msra.mxu0 0.0
    %315 = vmatprep.subr.mxu0 0.0
    %316 = vmatpush1.msra.mxu0 0.0
    %317 = vmatprep.subr.mxu0 0.0
    %318 = vmatpush1.msra.mxu0 0.0
    %319 = vmatprep.subr.mxu0 0.0
    %320 = vmatpush1.msra.mxu0 0.0
    %321 = vmatprep.subr.mxu0 0.0
    %322 = vmatpush1.msra.mxu0 0.0
    %323 = vmatprep.subr.mxu0 0.0
    %324 = vmatpush1.msra.mxu0 0.0
    %325 = vmatprep.subr.mxu0 0.0
    %326 = vmatpush1.msra.mxu0 0.0
    %327 = vmatprep.subr.mxu0 0.0
    %328 = vmatpush1.msra.mxu0 0.0
    %329 = vmatprep.subr.mxu0 0.0
    %330 = vmatpush1.msra.mxu0 0.0
    %331 = vmatprep.subr.mxu0 0.0
    %332 = vmatpush1.msra.mxu0 0.0
    %333 = vmatprep.subr.mxu0 0.0
    %334 = vmatpush1.msra.mxu0 0.0
    %335 = vmatprep.subr.mxu0 0.0
    %336 = vmatpush1.msra.mxu0 0.0
    %337 = vmatprep.subr.mxu0 0.0
    %338 = vmatpush1.msra.mxu0 0.0
    %339 = vmatprep.subr.mxu0 0.0
    %340 = vmatpush1.msra.mxu0 0.0
    %341 = vmatprep.subr.mxu0 0.0
    %342 = vmatpush1.msra.mxu0 0.0
    %343 = vmatprep.subr.mxu0 0.0
    %344 = vmatpush1.msra.mxu0 0.0
    %345 = vmatprep.subr.mxu0 0.0
    %346 = vmatpush1.msra.mxu0 0.0
    %347 = vmatprep.mubr.f32.mxu0 0.0
    %348 = vmatmul.mubr.f32.gmra.mrb[0].mxu0 %v59
    %v349 = vpop.f32.mrb[0].mxu0
    %v350 = vadd.f32 0.0, %v349
    %v351 = vpop.f32.mrb[0].mxu0
    %352 = vmatprep.mubr.f32.mxu0 0.0
    %353 = vmatmul.mubr.f32.gmra.mrb[0].mxu0 %v62
    %v354 = vpop.f32.mrb[0].mxu0
    %v355 = vadd.f32 0.0, %v354
    %v356 = vpop.f32.mrb[0].mxu0
    %357 = vmatprep.mubr.f32.mxu0 0.0
    %358 = vmatmul.mubr.f32.gmra.mrb[0].mxu0 %v65
    %v359 = vpop.f32.mrb[0].mxu0
    %v360 = vadd.f32 0.0, %v359
    %v361 = vpop.f32.mrb[0].mxu0
    %362 = vmatprep.mubr.f32.mxu0 0.0
    %363 = vmatmul.mubr.f32.gmra.mrb[0].mxu0 %v68
    %v364 = vpop.f32.mrb[0].mxu0
    %v365 = vadd.f32 0.0, %v364
    %v366 = vpop.f32.mrb[0].mxu0
    %367 = vmatprep.mubr.f32.mxu0 0.0
    %368 = vmatmul.mubr.f32.gmra.mrb[0].mxu0 %v71
    %v369 = vpop.f32.mrb[0].mxu0
    %v370 = vadd.f32 0.0, %v369
    %v371 = vpop.f32.mrb[0].mxu0
    %372 = vmatprep.mubr.f32.mxu0 0.0
    %373 = vmatmul.mubr.f32.gmra.mrb[0].mxu0 %v74
    %v374 = vpop.f32.mrb[0].mxu0
    %v375 = vadd.f32 0.0, %v374
    %v376 = vpop.f32.mrb[0].mxu0
    %377 = vmatprep.mubr.f32.mxu0 0.0
    %378 = vmatmul.mubr.f32.gmra.mrb[0].mxu0 %v77
    %v379 = vpop.f32.mrb[0].mxu0
    %v380 = vadd.f32 0.0, %v379
    %v381 = vpop.f32.mrb[0].mxu0
    %382 = vmatprep.mubr.f32.mxu0 0.0
    %383 = vmatmul.mubr.f32.gmra.mrb[0].mxu0 %v80
    %v384 = vpop.f32.mrb[0].mxu0
    %v385 = vadd.f32 0.0, %v384
    %v386 = vpop.f32.mrb[0].mxu0
    %387 = vdwg.mxu0
    %v389 = vsel %vm57, %v350, 0
    %v392 = vsel %vm57, %v355, 0
    %v395 = vsel %vm57, %v360, 0
    %v398 = vsel %vm57, %v365, 0
    %400 = vmatprep.subr.mxu0 0.0
    %401 = vmatpush1.msra.mxu0 %v35
    %402 = vmatprep.subr.mxu0 0.0
    %403 = vmatpush1.msra.mxu0 %v36
    %404 = vmatprep.subr.mxu0 0.0
    %405 = vmatpush1.msra.mxu0 %v37
    %406 = vmatprep.subr.mxu0 0.0
    %407 = vmatpush1.msra.mxu0 %v38
    %408 = vmatprep.subr.mxu0 0.0
    %409 = vmatpush1.msra.mxu0 0.0
    %410 = vmatprep.subr.mxu0 0.0
    %411 = vmatpush1.msra.mxu0 0.0
    %412 = vmatprep.subr.mxu0 0.0
    %413 = vmatpush1.msra.mxu0 0.0
    %414 = vmatprep.subr.mxu0 0.0
    %415 = vmatpush1.msra.mxu0 0.0
    %416 = vmatprep.subr.mxu0 0.0
    %417 = vmatpush1.msra.mxu0 0.0
    %418 = vmatprep.subr.mxu0 0.0
    %419 = vmatpush1.msra.mxu0 0.0
    %420 = vmatprep.subr.mxu0 0.0
    %421 = vmatpush1.msra.mxu0 0.0
    %422 = vmatprep.subr.mxu0 0.0
    %423 = vmatpush1.msra.mxu0 0.0
    %424 = vmatprep.subr.mxu0 0.0
    %425 = vmatpush1.msra.mxu0 0.0
    %426 = vmatprep.subr.mxu0 0.0
    %427 = vmatpush1.msra.mxu0 0.0
    %428 = vmatprep.subr.mxu0 0.0
    %429 = vmatpush1.msra.mxu0 0.0
    %430 = vmatprep.subr.mxu0 0.0
    %431 = vmatpush1.msra.mxu0 0.0
    %432 = vmatprep.subr.mxu0 0.0
    %433 = vmatpush1.msra.mxu0 0.0
    %434 = vmatprep.subr.mxu0 0.0
    %435 = vmatpush1.msra.mxu0 0.0
    %436 = vmatprep.subr.mxu0 0.0
    %437 = vmatpush1.msra.mxu0 0.0
    %438 = vmatprep.subr.mxu0 0.0
    %439 = vmatpush1.msra.mxu0 0.0
    %440 = vmatprep.subr.mxu0 0.0
    %441 = vmatpush1.msra.mxu0 0.0
    %442 = vmatprep.subr.mxu0 0.0
    %443 = vmatpush1.msra.mxu0 0.0
    %444 = vmatprep.subr.mxu0 0.0
    %445 = vmatpush1.msra.mxu0 0.0
    %446 = vmatprep.subr.mxu0 0.0
    %447 = vmatpush1.msra.mxu0 0.0
    %448 = vmatprep.subr.mxu0 0.0
    %449 = vmatpush1.msra.mxu0 0.0
    %450 = vmatprep.subr.mxu0 0.0
    %451 = vmatpush1.msra.mxu0 0.0
    %452 = vmatprep.subr.mxu0 0.0
    %453 = vmatpush1.msra.mxu0 0.0
    %454 = vmatprep.subr.mxu0 0.0
    %455 = vmatpush1.msra.mxu0 0.0
    %456 = vmatprep.subr.mxu0 0.0
    %457 = vmatpush1.msra.mxu0 0.0
    %458 = vmatprep.subr.mxu0 0.0
    %459 = vmatpush1.msra.mxu0 0.0
    %460 = vmatprep.subr.mxu0 0.0
    %461 = vmatpush1.msra.mxu0 0.0
    %462 = vmatprep.subr.mxu0 0.0
    %463 = vmatpush1.msra.mxu0 0.0
    %464 = vmatprep.mubr.f32.mxu0 0.0
    %465 = vmatmul.mubr.f32.gmra.mrb[0].mxu0 %v389
    %v466 = vpop.f32.mrb[0].mxu0
    %v467 = vadd.f32 0.0, %v466
    %v468 = vpop.f32.mrb[0].mxu0
    %469 = vmatprep.mubr.f32.mxu0 0.0
    %470 = vmatmul.mubr.f32.gmra.mrb[0].mxu0 %v392
    %v471 = vpop.f32.mrb[0].mxu0
    %v472 = vadd.f32 0.0, %v471
    %v473 = vpop.f32.mrb[0].mxu0
    %474 = vmatprep.mubr.f32.mxu0 0.0
    %475 = vmatmul.mubr.f32.gmra.mrb[0].mxu0 %v395
    %v476 = vpop.f32.mrb[0].mxu0
    %v477 = vadd.f32 0.0, %v476
    %v478 = vpop.f32.mrb[0].mxu0
    %479 = vmatprep.mubr.f32.mxu0 0.0
    %480 = vmatmul.mubr.f32.gmra.mrb[0].mxu0 %v398
    %v481 = vpop.f32.mrb[0].mxu0
    %v482 = vadd.f32 0.0, %v481
    %v483 = vpop.f32.mrb[0].mxu0
    %484 = vdwg.mxu0
    %v486 = vsel %vm57, %v279, 0
    %v489 = vsel %vm57, %v280, 0
    %v492 = vsel %vm57, %v281, 0
    %v495 = vsel %vm57, %v282, 0
    %497 = vmatprep.subr.mxu0 0.0
    %498 = vmatpush1.msra.mxu0 %v31
    %499 = vmatprep.subr.mxu0 0.0
    %500 = vmatpush1.msra.mxu0 %v32
    %501 = vmatprep.subr.mxu0 0.0
    %502 = vmatpush1.msra.mxu0 %v33
    %503 = vmatprep.subr.mxu0 0.0
    %504 = vmatpush1.msra.mxu0 %v34
    %505 = vmatprep.subr.mxu0 0.0
    %506 = vmatpush1.msra.mxu0 0.0
    %507 = vmatprep.subr.mxu0 0.0
    %508 = vmatpush1.msra.mxu0 0.0
    %509 = vmatprep.subr.mxu0 0.0
    %510 = vmatpush1.msra.mxu0 0.0
    %511 = vmatprep.subr.mxu0 0.0
    %512 = vmatpush1.msra.mxu0 0.0
    %513 = vmatprep.subr.mxu0 0.0
    %514 = vmatpush1.msra.mxu0 0.0
    %515 = vmatprep.subr.mxu0 0.0
    %516 = vmatpush1.msra.mxu0 0.0
    %517 = vmatprep.subr.mxu0 0.0
    %518 = vmatpush1.msra.mxu0 0.0
    %519 = vmatprep.subr.mxu0 0.0
    %520 = vmatpush1.msra.mxu0 0.0
    %521 = vmatprep.subr.mxu0 0.0
    %522 = vmatpush1.msra.mxu0 0.0
    %523 = vmatprep.subr.mxu0 0.0
    %524 = vmatpush1.msra.mxu0 0.0
    %525 = vmatprep.subr.mxu0 0.0
    %526 = vmatpush1.msra.mxu0 0.0
    %527 = vmatprep.subr.mxu0 0.0
    %528 = vmatpush1.msra.mxu0 0.0
    %529 = vmatprep.subr.mxu0 0.0
    %530 = vmatpush1.msra.mxu0 0.0
    %531 = vmatprep.subr.mxu0 0.0
    %532 = vmatpush1.msra.mxu0 0.0
    %533 = vmatprep.subr.mxu0 0.0
    %534 = vmatpush1.msra.mxu0 0.0
    %535 = vmatprep.subr.mxu0 0.0
    %536 = vmatpush1.msra.mxu0 0.0
    %537 = vmatprep.subr.mxu0 0.0
    %538 = vmatpush1.msra.mxu0 0.0
    %539 = vmatprep.subr.mxu0 0.0
    %540 = vmatpush1.msra.mxu0 0.0
    %541 = vmatprep.subr.mxu0 0.0
    %542 = vmatpush1.msra.mxu0 0.0
    %543 = vmatprep.subr.mxu0 0.0
    %544 = vmatpush1.msra.mxu0 0.0
    %545 = vmatprep.subr.mxu0 0.0
    %546 = vmatpush1.msra.mxu0 0.0
    %547 = vmatprep.subr.mxu0 0.0
    %548 = vmatpush1.msra.mxu0 0.0
    %549 = vmatprep.subr.mxu0 0.0
    %550 = vmatpush1.msra.mxu0 0.0
    %551 = vmatprep.subr.mxu0 0.0
    %552 = vmatpush1.msra.mxu0 0.0
    %553 = vmatprep.subr.mxu0 0.0
    %554 = vmatpush1.msra.mxu0 0.0
    %555 = vmatprep.subr.mxu0 0.0
    %556 = vmatpush1.msra.mxu0 0.0
    %557 = vmatprep.subr.mxu0 0.0
    %558 = vmatpush1.msra.mxu0 0.0
    %559 = vmatprep.subr.mxu0 0.0
    %560 = vmatpush1.msra.mxu0 0.0
    %561 = vmatprep.mubr.f32.mxu0 0.0
    %562 = vmatmul.mubr.f32.gmra.mrb[0].mxu0 %v486
    %v563 = vpop.f32.mrb[0].mxu0
    %v564 = vadd.f32 %v467, %v563
    %v565 = vpop.f32.mrb[0].mxu0
    %566 = vmatprep.mubr.f32.mxu0 0.0
    %567 = vmatmul.mubr.f32.gmra.mrb[0].mxu0 %v489
    %v568 = vpop.f32.mrb[0].mxu0
    %v569 = vadd.f32 %v472, %v568
    %v570 = vpop.f32.mrb[0].mxu0
    %571 = vmatprep.mubr.f32.mxu0 0.0
    %572 = vmatmul.mubr.f32.gmra.mrb[0].mxu0 %v492
    %v573 = vpop.f32.mrb[0].mxu0
    %v574 = vadd.f32 %v477, %v573
    %v575 = vpop.f32.mrb[0].mxu0
    %576 = vmatprep.mubr.f32.mxu0 0.0
    %577 = vmatmul.mubr.f32.gmra.mrb[0].mxu0 %v495
    %v578 = vpop.f32.mrb[0].mxu0
    %v579 = vadd.f32 %v482, %v578
    %v580 = vpop.f32.mrb[0].mxu0
    %581 = vdwg.mxu0
    %v583 = vsel %vm57, %v370, 0
    %v586 = vsel %vm57, %v375, 0
    %v589 = vsel %vm57, %v380, 0
    %v592 = vsel %vm57, %v385, 0
    %594 = vmatprep.subr.mxu0 0.0
    %595 = vmatpush1.msra.mxu0 %v39
    %596 = vmatprep.subr.mxu0 0.0
    %597 = vmatpush1.msra.mxu0 %v40
    %598 = vmatprep.subr.mxu0 0.0
    %599 = vmatpush1.msra.mxu0 %v41
    %600 = vmatprep.subr.mxu0 0.0
    %601 = vmatpush1.msra.mxu0 %v42
    %602 = vmatprep.subr.mxu0 0.0
    %603 = vmatpush1.msra.mxu0 0.0
    %604 = vmatprep.subr.mxu0 0.0
    %605 = vmatpush1.msra.mxu0 0.0
    %606 = vmatprep.subr.mxu0 0.0
    %607 = vmatpush1.msra.mxu0 0.0
    %608 = vmatprep.subr.mxu0 0.0
    %609 = vmatpush1.msra.mxu0 0.0
    %610 = vmatprep.subr.mxu0 0.0
    %611 = vmatpush1.msra.mxu0 0.0
    %612 = vmatprep.subr.mxu0 0.0
    %613 = vmatpush1.msra.mxu0 0.0
    %614 = vmatprep.subr.mxu0 0.0
    %615 = vmatpush1.msra.mxu0 0.0
    %616 = vmatprep.subr.mxu0 0.0
    %617 = vmatpush1.msra.mxu0 0.0
    %618 = vmatprep.subr.mxu0 0.0
    %619 = vmatpush1.msra.mxu0 0.0
    %620 = vmatprep.subr.mxu0 0.0
    %621 = vmatpush1.msra.mxu0 0.0
    %622 = vmatprep.subr.mxu0 0.0
    %623 = vmatpush1.msra.mxu0 0.0
    %624 = vmatprep.subr.mxu0 0.0
    %625 = vmatpush1.msra.mxu0 0.0
    %626 = vmatprep.subr.mxu0 0.0
    %627 = vmatpush1.msra.mxu0 0.0
    %628 = vmatprep.subr.mxu0 0.0
    %629 = vmatpush1.msra.mxu0 0.0
    %630 = vmatprep.subr.mxu0 0.0
    %631 = vmatpush1.msra.mxu0 0.0
    %632 = vmatprep.subr.mxu0 0.0
    %633 = vmatpush1.msra.mxu0 0.0
    %634 = vmatprep.subr.mxu0 0.0
    %635 = vmatpush1.msra.mxu0 0.0
    %636 = vmatprep.subr.mxu0 0.0
    %637 = vmatpush1.msra.mxu0 0.0
    %638 = vmatprep.subr.mxu0 0.0
    %639 = vmatpush1.msra.mxu0 0.0
    %640 = vmatprep.subr.mxu0 0.0
    %641 = vmatpush1.msra.mxu0 0.0
    %642 = vmatprep.subr.mxu0 0.0
    %643 = vmatpush1.msra.mxu0 0.0
    %644 = vmatprep.subr.mxu0 0.0
    %645 = vmatpush1.msra.mxu0 0.0
    %646 = vmatprep.subr.mxu0 0.0
    %647 = vmatpush1.msra.mxu0 0.0
    %648 = vmatprep.subr.mxu0 0.0
    %649 = vmatpush1.msra.mxu0 0.0
    %650 = vmatprep.subr.mxu0 0.0
    %651 = vmatpush1.msra.mxu0 0.0
    %652 = vmatprep.subr.mxu0 0.0
    %653 = vmatpush1.msra.mxu0 0.0
    %654 = vmatprep.subr.mxu0 0.0
    %655 = vmatpush1.msra.mxu0 0.0
    %656 = vmatprep.subr.mxu0 0.0
    %657 = vmatpush1.msra.mxu0 0.0
    %658 = vmatprep.mubr.f32.mxu0 0.0
    %659 = vmatmul.mubr.f32.gmra.mrb[0].mxu0 %v583
    %v660 = vpop.f32.mrb[0].mxu0
    %v661 = vadd.f32 0.0, %v660
    %v662 = vpop.f32.mrb[0].mxu0
    %663 = vmatprep.mubr.f32.mxu0 0.0
    %664 = vmatmul.mubr.f32.gmra.mrb[0].mxu0 %v586
    %v665 = vpop.f32.mrb[0].mxu0
    %v666 = vadd.f32 0.0, %v665
    %v667 = vpop.f32.mrb[0].mxu0
    %668 = vmatprep.mubr.f32.mxu0 0.0
    %669 = vmatmul.mubr.f32.gmra.mrb[0].mxu0 %v589
    %v670 = vpop.f32.mrb[0].mxu0
    %v671 = vadd.f32 0.0, %v670
    %v672 = vpop.f32.mrb[0].mxu0
    %673 = vmatprep.mubr.f32.mxu0 0.0
    %674 = vmatmul.mubr.f32.gmra.mrb[0].mxu0 %v592
    %v675 = vpop.f32.mrb[0].mxu0
    %v676 = vadd.f32 0.0, %v675
    %v677 = vpop.f32.mrb[0].mxu0
    %678 = vdwg.mxu0
    %v679 = vadd.f32 %v564, %v661
    %v680 = vadd.f32 %v569, %v666
    %v681 = vadd.f32 %v574, %v671
    %v682 = vadd.f32 %v579, %v676
    %v683 = vmax.f32 %v679, 0.0
    %v684 = vmax.f32 %v680, 0.0
    %v685 = vmax.f32 %v681, 0.0
    %v686 = vmax.f32 %v682, 0.0
    %v687 = vsel %vm57, %v683, -inf
    %v688 = vsel %vm57, %v684, -inf
    %v689 = vmax.f32 %v687, %v688
    %v690 = vrot.slane %v689, 4
    %v691 = vmax.f32 %v689, %v690
    %v692 = vrot.slane %v691, 2
    %v693 = vmax.f32 %v691, %v692
    %v694 = vrot.slane %v693, 1
    %v695 = vmax.f32 %v693, %v694
    %v696 = vsel %vm57, %v685, -inf
    %v697 = vsel %vm57, %v686, -inf
    %v698 = vmax.f32 %v696, %v697
    %v699 = vrot.slane %v698, 4
    %v700 = vmax.f32 %v698, %v699
    %v701 = vrot.slane %v700, 2
    %v702 = vmax.f32 %v700, %v701
    %v703 = vrot.slane %v702, 1
    %v704 = vmax.f32 %v702, %v703
    %v705 = vlaneseq
    %v706 = vshrl.u32 %v705, 7
    %v707 = vsub.s32 0, %v706
    %v708 = vrot.slane %v47, %v707
    %vm711 = vcmask 1041409
    %v712 = vsel %vm711, %v704, %v695
    %v713 = vsel %vm57, %v712, 0
    %715 = vmatprep.subr.mxu0 0.0
    %716 = vmatpush1.msra.mxu0 %v43
    %717 = vmatprep.subr.mxu0 0.0
    %718 = vmatpush1.msra.mxu0 %v44
    %719 = vmatprep.subr.mxu0 0.0
    %720 = vmatpush1.msra.mxu0 %v45
    %721 = vmatprep.subr.mxu0 0.0
    %722 = vmatpush1.msra.mxu0 %v46
    %723 = vmatprep.subr.mxu0 0.0
    %724 = vmatpush1.msra.mxu0 0.0
    %725 = vmatprep.subr.mxu0 0.0
    %726 = vmatpush1.msra.mxu0 0.0
    %727 = vmatprep.subr.mxu0 0.0
    %728 = vmatpush1.msra.mxu0 0.0
    %729 = vmatprep.subr.mxu0 0.0
    %730 = vmatpush1.msra.mxu0 0.0
    %731 = vmatprep.subr.mxu0 0.0
    %732 = vmatpush1.msra.mxu0 0.0
    %733 = vmatprep.subr.mxu0 0.0
    %734 = vmatpush1.msra.mxu0 0.0
    %735 = vmatprep.subr.mxu0 0.0
    %736 = vmatpush1.msra.mxu0 0.0
    %737 = vmatprep.subr.mxu0 0.0
    %738 = vmatpush1.msra.mxu0 0.0
    %739 = vmatprep.subr.mxu0 0.0
    %740 = vmatpush1.msra.mxu0 0.0
    %741 = vmatprep.subr.mxu0 0.0
    %742 = vmatpush1.msra.mxu0 0.0
    %743 = vmatprep.subr.mxu0 0.0
    %744 = vmatpush1.msra.mxu0 0.0
    %745 = vmatprep.subr.mxu0 0.0
    %746 = vmatpush1.msra.mxu0 0.0
    %747 = vmatprep.subr.mxu0 0.0
    %748 = vmatpush1.msra.mxu0 0.0
    %749 = vmatprep.subr.mxu0 0.0
    %750 = vmatpush1.msra.mxu0 0.0
    %751 = vmatprep.subr.mxu0 0.0
    %752 = vmatpush1.msra.mxu0 0.0
    %753 = vmatprep.subr.mxu0 0.0
    %754 = vmatpush1.msra.mxu0 0.0
    %755 = vmatprep.subr.mxu0 0.0
    %756 = vmatpush1.msra.mxu0 0.0
    %757 = vmatprep.subr.mxu0 0.0
    %758 = vmatpush1.msra.mxu0 0.0
    %759 = vmatprep.subr.mxu0 0.0
    %760 = vmatpush1.msra.mxu0 0.0
    %761 = vmatprep.subr.mxu0 0.0
    %762 = vmatpush1.msra.mxu0 0.0
    %763 = vmatprep.subr.mxu0 0.0
    %764 = vmatpush1.msra.mxu0 0.0
    %765 = vmatprep.subr.mxu0 0.0
    %766 = vmatpush1.msra.mxu0 0.0
    %767 = vmatprep.subr.mxu0 0.0
    %768 = vmatpush1.msra.mxu0 0.0
    %769 = vmatprep.subr.mxu0 0.0
    %770 = vmatpush1.msra.mxu0 0.0
    %771 = vmatprep.subr.mxu0 0.0
    %772 = vmatpush1.msra.mxu0 0.0
    %773 = vmatprep.subr.mxu0 0.0
    %774 = vmatpush1.msra.mxu0 0.0
    %775 = vmatprep.subr.mxu0 0.0
    %776 = vmatpush1.msra.mxu0 0.0
    %777 = vmatprep.subr.mxu0 0.0
    %778 = vmatpush1.msra.mxu0 0.0
    %779 = vmatprep.mubr.f32.mxu0 0.0
    %780 = vmatmul.mubr.f32.gmra.mrb[0].mxu0 %v713
    %v781 = vpop.f32.mrb[0].mxu0
    %v782 = vadd.f32 %v708, %v781
    %v783 = vpop.f32.mrb[0].mxu0
    %784 = vdwg.mxu0
    %v785 = vmax.f32 %v782, 0.0
    %v786 = vlaneseq
    %v787 = vshrl.u32 %v786, 7
    %v788 = vsub.s32 0, %v787
    %v789 = vrot.slane %v56, %v788
    %vm790 = vcmask 523264
    %v792 = vsel %vm790, %v785, 0
    %794 = vmatprep.subr.mxu0 0.0
    %795 = vmatpush1.msra.mxu0 %v48
    %796 = vmatprep.subr.mxu0 0.0
    %797 = vmatpush1.msra.mxu0 %v49
    %798 = vmatprep.subr.mxu0 0.0
    %799 = vmatpush1.msra.mxu0 %v50
    %800 = vmatprep.subr.mxu0 0.0
    %801 = vmatpush1.msra.mxu0 %v51
    %802 = vmatprep.subr.mxu0 0.0
    %803 = vmatpush1.msra.mxu0 %v52
    %804 = vmatprep.subr.mxu0 0.0
    %805 = vmatpush1.msra.mxu0 %v53
    %806 = vmatprep.subr.mxu0 0.0
    %807 = vmatpush1.msra.mxu0 %v54
    %808 = vmatprep.subr.mxu0 0.0
    %809 = vmatpush1.msra.mxu0 %v55
    %810 = vmatprep.subr.mxu0 0.0
    %811 = vmatpush1.msra.mxu0 0.0
    %812 = vmatprep.subr.mxu0 0.0
    %813 = vmatpush1.msra.mxu0 0.0
    %814 = vmatprep.subr.mxu0 0.0
    %815 = vmatpush1.msra.mxu0 0.0
    %816 = vmatprep.subr.mxu0 0.0
    %817 = vmatpush1.msra.mxu0 0.0
    %818 = vmatprep.subr.mxu0 0.0
    %819 = vmatpush1.msra.mxu0 0.0
    %820 = vmatprep.subr.mxu0 0.0
    %821 = vmatpush1.msra.mxu0 0.0
    %822 = vmatprep.subr.mxu0 0.0
    %823 = vmatpush1.msra.mxu0 0.0
    %824 = vmatprep.subr.mxu0 0.0
    %825 = vmatpush1.msra.mxu0 0.0
    %826 = vmatprep.subr.mxu0 0.0
    %827 = vmatpush1.msra.mxu0 0.0
    %828 = vmatprep.subr.mxu0 0.0
    %829 = vmatpush1.msra.mxu0 0.0
    %830 = vmatprep.subr.mxu0 0.0
    %831 = vmatpush1.msra.mxu0 0.0
    %832 = vmatprep.subr.mxu0 0.0
    %833 = vmatpush1.msra.mxu0 0.0
    %834 = vmatprep.subr.mxu0 0.0
    %835 = vmatpush1.msra.mxu0 0.0
    %836 = vmatprep.subr.mxu0 0.0
    %837 = vmatpush1.msra.mxu0 0.0
    %838 = vmatprep.subr.mxu0 0.0
    %839 = vmatpush1.msra.mxu0 0.0
    %840 = vmatprep.subr.mxu0 0.0
    %841 = vmatpush1.msra.mxu0 0.0
    %842 = vmatprep.subr.mxu0 0.0
    %843 = vmatpush1.msra.mxu0 0.0
    %844 = vmatprep.subr.mxu0 0.0
    %845 = vmatpush1.msra.mxu0 0.0
    %846 = vmatprep.subr.mxu0 0.0
    %847 = vmatpush1.msra.mxu0 0.0
    %848 = vmatprep.subr.mxu0 0.0
    %849 = vmatpush1.msra.mxu0 0.0
    %850 = vmatprep.subr.mxu0 0.0
    %851 = vmatpush1.msra.mxu0 0.0
    %852 = vmatprep.subr.mxu0 0.0
    %853 = vmatpush1.msra.mxu0 0.0
    %854 = vmatprep.subr.mxu0 0.0
    %855 = vmatpush1.msra.mxu0 0.0
    %856 = vmatprep.subr.mxu0 0.0
    %857 = vmatpush1.msra.mxu0 0.0
    %858 = vmatprep.mubr.f32.mxu0 0.0
    %859 = vmatmul.mubr.f32.gmra.mrb[0].mxu0 %v792
    %v860 = vpop.f32.mrb[0].mxu0
    %v861 = vadd.f32 %v789, %v860
    %v862 = vpop.f32.mrb[0].mxu0
    %863 = vdwg.mxu0
    %vm864 = vcmask 82944
    %865 = vst.msk [vmem:[#allocation2] sm:$0x3] %vm864, %v861
    // Predicated region
    $region18: #{backbone_forward.1} parent=1 // pred_check
      _
    $region19: #{backbone_forward.1} parent=1 // pred_check_branch
      %867 = sbr.rel (0) target = $region21
    $region20: #{backbone_forward.1} parent=1 // pred_region
      %s869 = ssub.s32 32, 32
      %870 = vsyncadd [#allocation3], %s869
      %s872 = sshll.u32 [#allocation2], 4
      %s873 = int_to_ptr.vmem [resolvable:$true] %s872
      %875 = dma.vmem_to_hbm [thread:$0]  %s873, 32, %s4, [#allocation3]
    $region21: #{backbone_forward.1} parent=1 // pred_fallthru
      _
    // Predicated region
    $region22: #{backbone_forward.1} parent=1 // pred_check
      _
    $region23: #{backbone_forward.1} parent=1 // pred_check_branch
      %877 = sbr.rel (0) target = $region25
    $region24: #{backbone_forward.1} parent=1 // pred_region
      %878 = dma.done [#allocation3], 32
    $region25: #{backbone_forward.1} parent=1 // pred_fallthru
      _
    %879 = vsyncpa [#allocation3], 1

</llo_original>
